<compile_context>
chip_gen: v7x
topology: tpu7x:2x2x1
jax: 0.10.0
libtpu: 0.0.40
codegen_flags: <defaults>
</compile_context>

<pallas_src>
import math
from functools import partial

import jax
import jax.numpy as jnp
from jax.experimental import pallas as pl
from jax.experimental.pallas import tpu as pltpu

LANE = 128        # lane-dense width used for every layer's columns
ROW_ALIGN = 16    # bf16 sublane tile (rows)


# ----------------------------------------------------------------------------
# Kernel
# ----------------------------------------------------------------------------
def _build_kernel(input_dims, in_row_offsets, seg_offsets, vec_off, vec_rows_pad,
                  num_hidden):
    """All arguments are static Python ints/tuples describing the packed layout."""
    n_in = len(input_dims)

    def kernel(*refs):
        in_refs = refs[:n_in]
        w_ref = refs[n_in]          # packed bf16 (rows, 128): weights + vec rows
        out_ref = refs[n_in + 1]    # (B, 128) f32

        # One whole-tile load of all per-feature vectors, upcast once to f32.
        # Row layout: [gamma_0, beta_0, gamma_1, beta_1, ..., final_bias, pad...]
        vecs = w_ref[vec_off:vec_off + vec_rows_pad, :].astype(jnp.float32)

        # ---- first Linear: split dots over the un-concatenated inputs.
        #      K = true input width, RHS rows start at 16-aligned offsets.
        #      Accumulate form (MRB-friendly on v7x).
        h = None
        for d, off, x_ref in zip(input_dims, in_row_offsets, in_refs):
            part = jnp.dot(x_ref[...].astype(jnp.bfloat16),
                           w_ref[off:off + d, :],
                           preferred_element_type=jnp.float32)
            h = part if h is None else h + part

        def bn_lrelu(h, l):
            gamma = vecs[2 * l:2 * l + 1, :]
            beta = vecs[2 * l + 1:2 * l + 2, :]
            # Single-pass batch stats (biased variance, eps=1e-5); gamma folded
            # into the rsqrt scale (rsqrt runs on the EUP slot).  Pad columns
            # have h==0 and gamma==0 -> stay exactly 0.
            mean = jnp.mean(h, axis=0, keepdims=True)
            var = jnp.maximum(jnp.mean(h * h, axis=0, keepdims=True) - mean * mean,
                              0.0)
            scale = gamma * jax.lax.rsqrt(var + 1e-5)
            shift = beta - mean * scale
            h = h * scale + shift
            return jnp.where(h > 0, h, 0.2 * h)          # LeakyReLU(0.2)

        bias = vecs[2 * num_hidden:2 * num_hidden + 1, :]
        if num_hidden == 0:
            y = h + bias
        else:
            h = bn_lrelu(h, 0)
            for l in range(1, num_hidden):
                off = seg_offsets[l]
                # Full 128x128 weight tile (zero-extended rows) -> no partial
                # slices; zero pad-columns of h contribute nothing.
                h = jnp.dot(h.astype(jnp.bfloat16), w_ref[off:off + LANE, :],
                            preferred_element_type=jnp.float32)
                h = bn_lrelu(h, l)
            off = seg_offsets[num_hidden]
            y = jnp.dot(h.astype(jnp.bfloat16), w_ref[off:off + LANE, :],
                        preferred_element_type=jnp.float32) + bias

        out_ref[...] = jax.nn.sigmoid(y)   # pad columns -> 0.5, sliced off outside

    return kernel


# ----------------------------------------------------------------------------
# Parameter construction + packing (deterministic, mimics nn.Linear init bounds)
# ----------------------------------------------------------------------------
def init_colorer_dropout_params(key, z_dim, audio_embedding_dim, num_layers,
                                emotion_dim=0):
    colors_count = 3  # the module overrides the constructor argument
    input_dims = [z_dim, audio_embedding_dim]
    if emotion_dim:
        input_dims.append(emotion_dim)
    in_features = sum(input_dims)
    out_features = colors_count
    feature_step = (in_features - out_features) // num_layers

    layer_dims, weights = [], []
    for _ in range(num_layers - 1):
        out_features = in_features - feature_step
        key, kw = jax.random.split(key)
        bound = 1.0 / math.sqrt(in_features)
        w = jax.random.uniform(kw, (in_features, out_features), jnp.float32,
                               -bound, bound)
        # Hidden-layer Linear bias intentionally omitted — training-mode BN
        # subtracts the per-feature batch mean, which cancels it exactly.
        weights.append(w)
        layer_dims.append((in_features, out_features))
        in_features = out_features

    key, kw, kb = jax.random.split(key, 3)
    bound = 1.0 / math.sqrt(in_features)
    wf = jax.random.uniform(kw, (in_features, colors_count * 3), jnp.float32,
                            -bound, bound)
    bf = jax.random.uniform(kb, (colors_count * 3,), jnp.float32, -bound, bound)
    weights.append(wf)
    layer_dims.append((in_features, colors_count * 3))

    # ---- row layout of the single packed bf16 block -------------------------
    # layer 0: one block per input, each at a 16-aligned row offset
    in_row_offsets, r = [], 0
    for d in input_dims:
        in_row_offsets.append(r)
        r += -(-d // ROW_ALIGN) * ROW_ALIGN
    seg_offsets = [0]                       # layer-0 segment starts at row 0
    for _ in range(1, num_layers):          # layers 1.. : 128 rows each (K=128)
        seg_offsets.append(r)
        r += LANE
    vec_off = r
    n_h = num_layers - 1
    vec_rows = 2 * n_h + 1                  # gamma/beta per hidden layer + bias
    vec_rows_pad = -(-vec_rows // ROW_ALIGN) * ROW_ALIGN
    total_rows = vec_off + vec_rows_pad

    packed = jnp.zeros((total_rows, LANE), jnp.float32)
    # first-layer weight split by input, 16-aligned row offsets
    w0, row = weights[0], 0
    for d, off in zip(input_dims, in_row_offsets):
        packed = packed.at[off:off + d, :w0.shape[1]].set(w0[row:row + d, :])
        row += d
    # remaining layers, zero-extended to 128 K-rows / 128 N-columns
    for l in range(1, num_layers):
        w = weights[l]
        packed = packed.at[seg_offsets[l]:seg_offsets[l] + w.shape[0],
                           :w.shape[1]].set(w)
    # gamma/beta (exact in bf16 at init) + final bias
    for l in range(n_h):
        out_l = layer_dims[l][1]
        packed = packed.at[vec_off + 2 * l, :out_l].set(1.0)     # gamma
        # beta rows stay zero
    packed = packed.at[vec_off + 2 * n_h, :colors_count * 3].set(bf)
    packed = packed.astype(jnp.bfloat16)

    return {
        "packed": packed,
        "input_dims": tuple(input_dims),
        "layer_dims": tuple(layer_dims),
        "in_row_offsets": tuple(in_row_offsets),
        "seg_offsets": tuple(seg_offsets),
        "vec_off": int(vec_off),
        "vec_rows_pad": int(vec_rows_pad),
        # raw f32 params kept only for the pure-JAX reference check in the demo
        "ref_weights": weights,
        "ref_bias": bf,
    }


# ----------------------------------------------------------------------------
# Forward wrapper
# ----------------------------------------------------------------------------
@partial(jax.jit, static_argnames=("input_dims", "in_row_offsets", "seg_offsets",
                                   "vec_off", "vec_rows_pad", "layer_dims"))
def _colorer_forward(packed, *inputs, input_dims, in_row_offsets, seg_offsets,
                     vec_off, vec_rows_pad, layer_dims):
    B = inputs[0].shape[0]
    num_hidden = len(layer_dims) - 1
    out_f = layer_dims[-1][1]
    kernel = _build_kernel(input_dims, in_row_offsets, seg_offsets, vec_off,
                           vec_rows_pad, num_hidden)

    # Advisory cost estimate so XLA treats this tiny custom call as cheap.
    flops = 2 * B * sum(i * o for i, o in layer_dims)
    transcendentals = B * LANE + num_hidden * LANE     # sigmoid exps + rsqrts
    bytes_accessed = (sum(B * d * 4 for d in input_dims)
                      + packed.shape[0] * LANE * 2 + B * LANE * 4)

    vmem = pl.BlockSpec(memory_space=pltpu.MemorySpace.VMEM)
    # No grid: training-mode BatchNorm needs full-batch statistics, so the batch
    # axis must stay in one kernel invocation; everything fits in VMEM.
    y = pl.pallas_call(
        kernel,
        out_shape=jax.ShapeDtypeStruct((B, LANE), jnp.float32),
        in_specs=[vmem] * (len(inputs) + 1),
        out_specs=vmem,
        cost_estimate=pl.CostEstimate(flops=int(flops),
                                      transcendentals=int(transcendentals),
                                      bytes_accessed=int(bytes_accessed)),
    )(*inputs, packed)
    return y[:, :out_f]   # drop lane padding (real outputs = colors_count*3 = 9)


def colorer_dropout_forward(params, noise, audio_embedding, emotions=None):
    inputs = [noise, audio_embedding]
    if emotions is not None:
        inputs.append(emotions)
    input_dims = tuple(int(x.shape[1]) for x in inputs)
    assert input_dims == params["input_dims"], (input_dims, params["input_dims"])
    return _colorer_forward(params["packed"], *inputs,
                            input_dims=input_dims,
                            in_row_offsets=params["in_row_offsets"],
                            seg_offsets=params["seg_offsets"],
                            vec_off=params["vec_off"],
                            vec_rows_pad=params["vec_rows_pad"],
                            layer_dims=params["layer_dims"])


# ----------------------------------------------------------------------------
# Demo
# ----------------------------------------------------------------------------
if __name__ == "__main__":
    # TODO(synk): the `Emotion` enum is not defined in the source file; the demo
    # runs with has_emotions=False (the kernel supports an optional third input).
    z_dim = 16
    audio_embedding_dim = 32
    num_layers = 3
    batch = 8

    key = jax.random.PRNGKey(0)
    kp, kn, ka = jax.random.split(key, 3)

    params = init_colorer_dropout_params(kp, z_dim, audio_embedding_dim,
                                         num_layers, emotion_dim=0)

    noise = jax.random.normal(kn, (batch, z_dim), jnp.float32)
    audio_embedding = jax.random.normal(ka, (batch, audio_embedding_dim),
                                        jnp.float32)

    out = colorer_dropout_forward(params, noise, audio_embedding, None)
    out = jax.block_until_ready(out)

    assert out.shape == (batch, 9), out.shape
    assert bool(jnp.all((out >= 0.0) & (out <= 1.0)))

    # pure-JAX f32 reference: concat -> [Linear -> BN(batch stats) -> LeakyReLU]*
    #                         -> Linear + bias -> sigmoid
    def reference(params, xs):
        h = jnp.concatenate(xs, axis=1)
        ws = params["ref_weights"]
        for l in range(len(ws) - 1):
            h = h @ ws[l]
            mean = h.mean(0, keepdims=True)
            var = ((h - mean) ** 2).mean(0, keepdims=True)
            h = (h - mean) * jax.lax.rsqrt(var + 1e-5)
            h = jnp.where(h > 0, h, 0.2 * h)
        y = h @ ws[-1] + params["ref_bias"]
        return jax.nn.sigmoid(y)

    ref = reference(params, [noise, audio_embedding])
    max_err = float(jnp.max(jnp.abs(out - ref)))
    assert max_err < 0.05, max_err   # bf16 MXU operands -> small deviation OK

    print("KERNEL_OK")
</pallas_src>

<mosaic_0001>
module attributes {stable_mosaic.version = 11 : i64} {
  func.func @kernel(%arg0: memref<8x16xf32, #tpu.memory_space<vmem>>, %arg1: memref<8x32xf32, #tpu.memory_space<vmem>>, %arg2: memref<320x128xbf16, #tpu.memory_space<vmem>>, %arg3: memref<8x128xf32, #tpu.memory_space<vmem>>) attributes {dimension_semantics = [], scalar_prefetch = 0 : i64, scratch_operands = 0 : i64, tpu.core_type = #tpu.core_type<tc>} {
    %c304 = arith.constant 304 : index
    %c0 = arith.constant 0 : index
    %0 = vector.load %arg2[%c304, %c0] : memref<320x128xbf16, #tpu.memory_space<vmem>>, vector<16x128xbf16>
    %1 = arith.extf %0 : vector<16x128xbf16> to vector<16x128xf32>
    %c0_0 = arith.constant 0 : index
    %c0_1 = arith.constant 0 : index
    %2 = vector.load %arg0[%c0_0, %c0_1] : memref<8x16xf32, #tpu.memory_space<vmem>>, vector<8x16xf32>
    %3 = arith.truncf %2 : vector<8x16xf32> to vector<8x16xbf16>
    %c0_2 = arith.constant 0 : index
    %c0_3 = arith.constant 0 : index
    %4 = vector.load %arg2[%c0_2, %c0_3] : memref<320x128xbf16, #tpu.memory_space<vmem>>, vector<16x128xbf16>
    %cst = arith.constant dense<0.000000e+00> : vector<8x128xf32>
    %5 = tpu.matmul %3, %4, %cst {dimension_numbers = #tpu.dot_dimension_numbers<[1], [0], [0], [1], [0, 0, 1, 1], [], []>} : vector<8x16xbf16>, vector<16x128xbf16>, vector<8x128xf32> -> vector<8x128xf32>
    %c0_4 = arith.constant 0 : index
    %c0_5 = arith.constant 0 : index
    %6 = vector.load %arg1[%c0_4, %c0_5] : memref<8x32xf32, #tpu.memory_space<vmem>>, vector<8x32xf32>
    %7 = arith.truncf %6 : vector<8x32xf32> to vector<8x32xbf16>
    %c16 = arith.constant 16 : index
    %c0_6 = arith.constant 0 : index
    %8 = vector.load %arg2[%c16, %c0_6] : memref<320x128xbf16, #tpu.memory_space<vmem>>, vector<32x128xbf16>
    %cst_7 = arith.constant dense<0.000000e+00> : vector<8x128xf32>
    %9 = tpu.matmul %7, %8, %cst_7 {dimension_numbers = #tpu.dot_dimension_numbers<[1], [0], [0], [1], [0, 0, 1, 1], [], []>} : vector<8x32xbf16>, vector<32x128xbf16>, vector<8x128xf32> -> vector<8x128xf32>
    %10 = arith.addf %5, %9 : vector<8x128xf32>
    %11 = vector.extract_strided_slice %1 {offsets = [4, 0], sizes = [1, 128], strides = [1, 1]} : vector<16x128xf32> to vector<1x128xf32>
    %12 = vector.extract_strided_slice %1 {offsets = [0, 0], sizes = [1, 128], strides = [1, 1]} : vector<16x128xf32> to vector<1x128xf32>
    %13 = vector.extract_strided_slice %1 {offsets = [1, 0], sizes = [1, 128], strides = [1, 1]} : vector<16x128xf32> to vector<1x128xf32>
    %cst_8 = arith.constant dense<0.000000e+00> : vector<128xf32>
    %14 = vector.multi_reduction <add>, %10, %cst_8 [0] : vector<8x128xf32> to vector<128xf32>
    %15 = vector.shape_cast %14 : vector<128xf32> to vector<1x128xf32>
    %cst_9 = arith.constant 8.000000e+00 : f32
    %16 = vector.broadcast %cst_9 : f32 to vector<1x128xf32>
    %17 = arith.divf %15, %16 : vector<1x128xf32>
    %18 = arith.mulf %10, %10 : vector<8x128xf32>
    %cst_10 = arith.constant dense<0.000000e+00> : vector<128xf32>
    %19 = vector.multi_reduction <add>, %18, %cst_10 [0] : vector<8x128xf32> to vector<128xf32>
    %20 = vector.shape_cast %19 : vector<128xf32> to vector<1x128xf32>
    %cst_11 = arith.constant 8.000000e+00 : f32
    %21 = vector.broadcast %cst_11 : f32 to vector<1x128xf32>
    %22 = arith.divf %20, %21 : vector<1x128xf32>
    %23 = arith.mulf %17, %17 : vector<1x128xf32>
    %24 = arith.subf %22, %23 : vector<1x128xf32>
    %cst_12 = arith.constant 0.000000e+00 : f32
    %25 = vector.broadcast %cst_12 : f32 to vector<1x128xf32>
    %26 = arith.maximumf %24, %25 : vector<1x128xf32>
    %cst_13 = arith.constant 9.99999974E-6 : f32
    %27 = vector.broadcast %cst_13 : f32 to vector<1x128xf32>
    %28 = arith.addf %26, %27 : vector<1x128xf32>
    %29 = math.rsqrt %28 : vector<1x128xf32>
    %30 = arith.mulf %12, %29 : vector<1x128xf32>
    %31 = arith.mulf %17, %30 : vector<1x128xf32>
    %32 = arith.subf %13, %31 : vector<1x128xf32>
    %33 = vector.broadcast %30 : vector<1x128xf32> to vector<8x128xf32>
    %34 = arith.mulf %10, %33 : vector<8x128xf32>
    %35 = vector.broadcast %32 : vector<1x128xf32> to vector<8x128xf32>
    %36 = arith.addf %34, %35 : vector<8x128xf32>
    %cst_14 = arith.constant 0.000000e+00 : f32
    %37 = vector.broadcast %cst_14 : f32 to vector<8x128xf32>
    %38 = arith.cmpf ogt, %36, %37 : vector<8x128xf32>
    %cst_15 = arith.constant 2.000000e-01 : f32
    %39 = vector.broadcast %cst_15 : f32 to vector<8x128xf32>
    %40 = arith.mulf %39, %36 : vector<8x128xf32>
    %41 = arith.select %38, %36, %40 : vector<8x128xi1>, vector<8x128xf32>
    %42 = arith.truncf %41 : vector<8x128xf32> to vector<8x128xbf16>
    %c48 = arith.constant 48 : index
    %c0_16 = arith.constant 0 : index
    %43 = vector.load %arg2[%c48, %c0_16] : memref<320x128xbf16, #tpu.memory_space<vmem>>, vector<128x128xbf16>
    %cst_17 = arith.constant dense<0.000000e+00> : vector<8x128xf32>
    %44 = tpu.matmul %42, %43, %cst_17 {dimension_numbers = #tpu.dot_dimension_numbers<[1], [0], [0], [1], [0, 0, 1, 1], [], []>} : vector<8x128xbf16>, vector<128x128xbf16>, vector<8x128xf32> -> vector<8x128xf32>
    %45 = vector.extract_strided_slice %1 {offsets = [2, 0], sizes = [1, 128], strides = [1, 1]} : vector<16x128xf32> to vector<1x128xf32>
    %46 = vector.extract_strided_slice %1 {offsets = [3, 0], sizes = [1, 128], strides = [1, 1]} : vector<16x128xf32> to vector<1x128xf32>
    %cst_18 = arith.constant dense<0.000000e+00> : vector<128xf32>
    %47 = vector.multi_reduction <add>, %44, %cst_18 [0] : vector<8x128xf32> to vector<128xf32>
    %48 = vector.shape_cast %47 : vector<128xf32> to vector<1x128xf32>
    %cst_19 = arith.constant 8.000000e+00 : f32
    %49 = vector.broadcast %cst_19 : f32 to vector<1x128xf32>
    %50 = arith.divf %48, %49 : vector<1x128xf32>
    %51 = arith.mulf %44, %44 : vector<8x128xf32>
    %cst_20 = arith.constant dense<0.000000e+00> : vector<128xf32>
    %52 = vector.multi_reduction <add>, %51, %cst_20 [0] : vector<8x128xf32> to vector<128xf32>
    %53 = vector.shape_cast %52 : vector<128xf32> to vector<1x128xf32>
    %cst_21 = arith.constant 8.000000e+00 : f32
    %54 = vector.broadcast %cst_21 : f32 to vector<1x128xf32>
    %55 = arith.divf %53, %54 : vector<1x128xf32>
    %56 = arith.mulf %50, %50 : vector<1x128xf32>
    %57 = arith.subf %55, %56 : vector<1x128xf32>
    %cst_22 = arith.constant 0.000000e+00 : f32
    %58 = vector.broadcast %cst_22 : f32 to vector<1x128xf32>
    %59 = arith.maximumf %57, %58 : vector<1x128xf32>
    %cst_23 = arith.constant 9.99999974E-6 : f32
    %60 = vector.broadcast %cst_23 : f32 to vector<1x128xf32>
    %61 = arith.addf %59, %60 : vector<1x128xf32>
    %62 = math.rsqrt %61 : vector<1x128xf32>
    %63 = arith.mulf %45, %62 : vector<1x128xf32>
    %64 = arith.mulf %50, %63 : vector<1x128xf32>
    %65 = arith.subf %46, %64 : vector<1x128xf32>
    %66 = vector.broadcast %63 : vector<1x128xf32> to vector<8x128xf32>
    %67 = arith.mulf %44, %66 : vector<8x128xf32>
    %68 = vector.broadcast %65 : vector<1x128xf32> to vector<8x128xf32>
    %69 = arith.addf %67, %68 : vector<8x128xf32>
    %cst_24 = arith.constant 0.000000e+00 : f32
    %70 = vector.broadcast %cst_24 : f32 to vector<8x128xf32>
    %71 = arith.cmpf ogt, %69, %70 : vector<8x128xf32>
    %cst_25 = arith.constant 2.000000e-01 : f32
    %72 = vector.broadcast %cst_25 : f32 to vector<8x128xf32>
    %73 = arith.mulf %72, %69 : vector<8x128xf32>
    %74 = arith.select %71, %69, %73 : vector<8x128xi1>, vector<8x128xf32>
    %75 = arith.truncf %74 : vector<8x128xf32> to vector<8x128xbf16>
    %c176 = arith.constant 176 : index
    %c0_26 = arith.constant 0 : index
    %76 = vector.load %arg2[%c176, %c0_26] : memref<320x128xbf16, #tpu.memory_space<vmem>>, vector<128x128xbf16>
    %cst_27 = arith.constant dense<0.000000e+00> : vector<8x128xf32>
    %77 = tpu.matmul %75, %76, %cst_27 {dimension_numbers = #tpu.dot_dimension_numbers<[1], [0], [0], [1], [0, 0, 1, 1], [], []>} : vector<8x128xbf16>, vector<128x128xbf16>, vector<8x128xf32> -> vector<8x128xf32>
    %78 = vector.broadcast %11 : vector<1x128xf32> to vector<8x128xf32>
    %79 = arith.addf %77, %78 : vector<8x128xf32>
    %80 = arith.negf %79 : vector<8x128xf32>
    %81 = math.exp %80 : vector<8x128xf32>
    %cst_28 = arith.constant 1.000000e+00 : f32
    %82 = vector.broadcast %cst_28 : f32 to vector<8x128xf32>
    %83 = arith.addf %82, %81 : vector<8x128xf32>
    %84 = arith.divf %82, %83 : vector<8x128xf32>
    %c0_29 = arith.constant 0 : index
    %c0_30 = arith.constant 0 : index
    %85 = vector.load %arg3[%c0_29, %c0_30] : memref<8x128xf32, #tpu.memory_space<vmem>>, vector<8x128xf32>
    tpu.vector_store %arg3[%c0_29, %c0_30], %84 {strides = array<i32>} : memref<8x128xf32, #tpu.memory_space<vmem>>, vector<8x128xf32>,
    return
  }
}

</mosaic_0001>

<llo_original>
// kernel: _colorer_forward.1
$region0: #{_colorer_forward.1}
  #allocation0 [shape = 'u32[]', space=smem, size = 0x4, offset = 0x4, fixed_abs, tag = 'smem constant byte address 0x4 - core index']
  #allocation1 [shape = 'u32[144,128]{1,0:T(1,128)}', space=vmem, size = 0x12000, scoped, tag = 'internal scratch']
  %s0 = inlined_call_operand.hbm [shape: f32[8,16], index: 0, kind: input, shape index: {}]
  %s1 = inlined_call_operand.hbm [shape: f32[8,32], index: 1, kind: input, shape index: {}]
  %s2 = inlined_call_operand.hbm [shape: bf16[320,128], index: 2, kind: input, shape index: {}]
  %s3 = inlined_call_operand.hbm [shape: f32[8,128], index: 3, kind: output, shape index: {}]
  %s4 = sld [smem:[#allocation0]]
  $region34: #{_colorer_forward.1} parent=0
    _
  %s6 = ssub.s32 1, %s4
  %s7 = scalar_select 0, %s6, %s4
  $region1: #{_colorer_forward.1} parent=0
    #allocation2 [shape = 'u8[4096]{0}', space=vmem, size = 0x1000, scoped, tag = 'input window, operand 0, single buffered']
    #allocation3 [shape = 's32[1]{0}', space=sflag, size = 0x4, scoped, tag = 'scoped memory for _colorer_forward.1']
    #allocation4 [shape = 's32[1]{0}', space=sflag, size = 0x4, scoped, tag = 'scoped memory for _colorer_forward.1']
    #allocation5 [shape = 'u8[4096]{0}', space=vmem, size = 0x1000, scoped, tag = 'input window, operand 1, single buffered']
    #allocation6 [shape = 's32[1]{0}', space=sflag, size = 0x4, scoped, tag = 'scoped memory for _colorer_forward.1']
    #allocation7 [shape = 'u8[81920]{0}', space=vmem, size = 0x14000, scoped, tag = 'input window, operand 2, single buffered']
    #allocation8 [shape = 'u8[4096]{0}', space=vmem, size = 0x1000, scoped, tag = 'output window, operand 0, single buffered']
    %8 = vsyncpa [#allocation3], 0
    %9 = vsyncpa [#allocation6], 0
    %10 = vsyncpa [#allocation4], 0
    // Predicated region
    $region2: #{_colorer_forward.1} parent=1 // pred_check
      _
    $region3: #{_colorer_forward.1} parent=1 // pred_check_branch
      %12 = sbr.rel (0) target = $region5
    $region4: #{_colorer_forward.1} parent=1 // pred_region
      %s14 = ssub.s32 128, 128
      %15 = vsyncadd [#allocation3], %s14
      %s17 = sshll.u32 [#allocation2], 4
      %s18 = int_to_ptr.vmem [resolvable:$true] %s17
      %20 = dma.hbm_to_vmem [thread:$0]  %s0, 128, %s18, [#allocation3]
    $region5: #{_colorer_forward.1} parent=1 // pred_fallthru
      _
    // Predicated region
    $region6: #{_colorer_forward.1} parent=1 // pred_check
      _
    $region7: #{_colorer_forward.1} parent=1 // pred_check_branch
      %22 = sbr.rel (0) target = $region9
    $region8: #{_colorer_forward.1} parent=1 // pred_region
      %s24 = ssub.s32 128, 128
      %25 = vsyncadd [#allocation6], %s24
      %s27 = sshll.u32 [#allocation5], 4
      %s28 = int_to_ptr.vmem [resolvable:$true] %s27
      %30 = dma.hbm_to_vmem [thread:$0]  %s1, 128, %s28, [#allocation6]
    $region9: #{_colorer_forward.1} parent=1 // pred_fallthru
      _
    // Predicated region
    $region10: #{_colorer_forward.1} parent=1 // pred_check
      _
    $region11: #{_colorer_forward.1} parent=1 // pred_check_branch
      %32 = sbr.rel (0) target = $region13
    $region12: #{_colorer_forward.1} parent=1 // pred_region
      %s34 = ssub.s32 2560, 2560
      %35 = vsyncadd [#allocation6], %s34
      %s36 = sshll.u32 [#allocation7], 4
      %s37 = int_to_ptr.vmem [resolvable:$true] %s36
      %42 = dma.hbm_to_vmem [thread:$0]  %s2, 2560, %s37, [#allocation6], 64, 64, 4
    $region13: #{_colorer_forward.1} parent=1 // pred_fallthru
      _
    // Predicated region
    $region14: #{_colorer_forward.1} parent=1 // pred_check
      _
    $region15: #{_colorer_forward.1} parent=1 // pred_check_branch
      %44 = sbr.rel (0) target = $region17
    $region16: #{_colorer_forward.1} parent=1 // pred_region
      %45 = dma.done [#allocation3], 128
    $region17: #{_colorer_forward.1} parent=1 // pred_fallthru
      _
    // Predicated region
    $region18: #{_colorer_forward.1} parent=1 // pred_check
      _
    $region19: #{_colorer_forward.1} parent=1 // pred_check_branch
      %47 = sbr.rel (0) target = $region21
    $region20: #{_colorer_forward.1} parent=1 // pred_region
      %48 = dma.done [#allocation6], 128
    $region21: #{_colorer_forward.1} parent=1 // pred_fallthru
      _
    // Predicated region
    $region22: #{_colorer_forward.1} parent=1 // pred_check
      _
    $region23: #{_colorer_forward.1} parent=1 // pred_check_branch
      %50 = sbr.rel (0) target = $region25
    $region24: #{_colorer_forward.1} parent=1 // pred_region
      %51 = dma.done [#allocation6], 2560
    $region25: #{_colorer_forward.1} parent=1 // pred_fallthru
      _
    %v53 = vld [vmem:[#allocation7 + $0x98] sm:$0xf]
    %v54 = vunpack.c.l.bf16 %v53
    %v55 = vld [vmem:[#allocation2] sm:$0xff]
    %v56 = vpack.c.bf16 %v55, %v55
    %v57 = vld [vmem:[#allocation7] sm:$0xf]
    %v58 = vld [vmem:[#allocation7 + $0x4] sm:$0xf]
    %v59 = vld [vmem:[#allocation5] sm:$0xff]
    %v60 = vpack.c.bf16 %v59, %v59
    %v61 = vld [vmem:[#allocation7 + $0x8] sm:$0xf]
    %v62 = vld [vmem:[#allocation7 + $0xc] sm:$0xf]
    %v63 = vld [vmem:[#allocation7 + $0x10] sm:$0xf]
    %v64 = vld [vmem:[#allocation7 + $0x14] sm:$0xf]
    %v69 = vunpack.c.l.b16 %v61
    %v70 = vunpack.c.l.b16 %v62
    %v71 = vunpack.c.l.b16 %v63
    %v72 = vunpack.c.l.b16 %v64
    %v73 = vpack.c.b16 %v70, %v69
    %v74 = vpack.c.b16 %v72, %v71
    %vm77 = vcmask 261120
    %v79 = vsel %vm77, %v60, 0
    %81 = vmatprep.subr.bf16.mxu0 0
    %82 = vmatpush1.bf16.msra.mxu0 %v73
    %83 = vmatprep.subr.bf16.mxu0 0
    %84 = vmatpush1.bf16.msra.mxu0 %v74
    %85 = vmatprep.subr.bf16.mxu0 0
    %86 = vmatpush1.bf16.msra.mxu0 0
    %87 = vmatprep.subr.bf16.mxu0 0
    %88 = vmatpush1.bf16.msra.mxu0 0
    %89 = vmatprep.subr.bf16.mxu0 0
    %90 = vmatpush1.bf16.msra.mxu0 0
    %91 = vmatprep.subr.bf16.mxu0 0
    %92 = vmatpush1.bf16.msra.mxu0 0
    %93 = vmatprep.subr.bf16.mxu0 0
    %94 = vmatpush1.bf16.msra.mxu0 0
    %95 = vmatprep.subr.bf16.mxu0 0
    %96 = vmatpush1.bf16.msra.mxu0 0
    %97 = vmatprep.subr.bf16.mxu0 0
    %98 = vmatpush1.bf16.msra.mxu0 0
    %99 = vmatprep.subr.bf16.mxu0 0
    %100 = vmatpush1.bf16.msra.mxu0 0
    %101 = vmatprep.subr.bf16.mxu0 0
    %102 = vmatpush1.bf16.msra.mxu0 0
    %103 = vmatprep.subr.bf16.mxu0 0
    %104 = vmatpush1.bf16.msra.mxu0 0
    %105 = vmatprep.subr.bf16.mxu0 0
    %106 = vmatpush1.bf16.msra.mxu0 0
    %107 = vmatprep.subr.bf16.mxu0 0
    %108 = vmatpush1.bf16.msra.mxu0 0
    %109 = vmatprep.subr.bf16.mxu0 0
    %110 = vmatpush1.bf16.msra.mxu0 0
    %111 = vmatprep.subr.bf16.mxu0 0
    %112 = vmatpush1.bf16.msra.mxu0 0
    %113 = vmatprep.mubr.bf16.mxu0 0
    %114 = vmatmul.mubr.bf16.gmra.mrb[0].mxu0 %v79
    %v115 = vpop.f32.mrb[0].mxu0
    %v116 = vadd.f32 0.0, %v115
    %v117 = vpop.f32.mrb[0].mxu0
    %v118 = vpop.f32.mrb[0].mxu0
    %v119 = vpop.f32.mrb[0].mxu0
    %120 = vdwg.mxu0
    %v123 = vunpack.c.l.b16 %v57
    %v124 = vunpack.c.l.b16 %v58
    %v125 = vpack.c.b16 %v124, %v123
    %vm127 = vcmask 130048
    %v129 = vsel %vm127, %v56, 0
    %131 = vmatprep.subr.bf16.mxu0 0
    %132 = vmatpush1.bf16.msra.mxu0 %v125
    %133 = vmatprep.subr.bf16.mxu0 0
    %134 = vmatpush1.bf16.msra.mxu0 0
    %135 = vmatprep.subr.bf16.mxu0 0
    %136 = vmatpush1.bf16.msra.mxu0 0
    %137 = vmatprep.subr.bf16.mxu0 0
    %138 = vmatpush1.bf16.msra.mxu0 0
    %139 = vmatprep.subr.bf16.mxu0 0
    %140 = vmatpush1.bf16.msra.mxu0 0
    %141 = vmatprep.subr.bf16.mxu0 0
    %142 = vmatpush1.bf16.msra.mxu0 0
    %143 = vmatprep.subr.bf16.mxu0 0
    %144 = vmatpush1.bf16.msra.mxu0 0
    %145 = vmatprep.subr.bf16.mxu0 0
    %146 = vmatpush1.bf16.msra.mxu0 0
    %147 = vmatprep.subr.bf16.mxu0 0
    %148 = vmatpush1.bf16.msra.mxu0 0
    %149 = vmatprep.subr.bf16.mxu0 0
    %150 = vmatpush1.bf16.msra.mxu0 0
    %151 = vmatprep.subr.bf16.mxu0 0
    %152 = vmatpush1.bf16.msra.mxu0 0
    %153 = vmatprep.subr.bf16.mxu0 0
    %154 = vmatpush1.bf16.msra.mxu0 0
    %155 = vmatprep.subr.bf16.mxu0 0
    %156 = vmatpush1.bf16.msra.mxu0 0
    %157 = vmatprep.subr.bf16.mxu0 0
    %158 = vmatpush1.bf16.msra.mxu0 0
    %159 = vmatprep.subr.bf16.mxu0 0
    %160 = vmatpush1.bf16.msra.mxu0 0
    %161 = vmatprep.subr.bf16.mxu0 0
    %162 = vmatpush1.bf16.msra.mxu0 0
    %163 = vmatprep.mubr.bf16.mxu0 0
    %164 = vmatmul.mubr.bf16.gmra.mrb[0].mxu0 %v129
    %v165 = vpop.f32.mrb[0].mxu0
    %v166 = vadd.f32 %v116, %v165
    %v167 = vpop.f32.mrb[0].mxu0
    %v168 = vpop.f32.mrb[0].mxu0
    %v169 = vpop.f32.mrb[0].mxu0
    %170 = vdwg.mxu0
    %v171 = vrot.slane %v166, 4
    %v172 = vadd.f32 %v166, %v171
    %v173 = vrot.slane %v172, 2
    %v174 = vadd.f32 %v172, %v173
    %v175 = vrot.slane %v174, 1
    %v176 = vadd.f32 %v174, %v175
    %v177 = vrcp.pop 8.0
    %v178 = vmul.f32 %v176, %v177
    %v179 = vmul.f32 %v166, %v166
    %v180 = vrot.slane %v179, 4
    %v181 = vadd.f32 %v179, %v180
    %v182 = vrot.slane %v181, 2
    %v183 = vadd.f32 %v181, %v182
    %v184 = vrot.slane %v183, 1
    %v185 = vadd.f32 %v183, %v184
    %v186 = vmul.f32 %v185, %v177
    %v187 = vmul.f32 %v178, %v178
    %v188 = vsub.f32 %v186, %v187
    %v189 = vmax.f32 %v188, 0.0
    %v190 = vadd.f32 %v189, 1e-05
    %v191 = vrsqrt.pop %v190
    %v192 = vmul.f32 %v54, %v191
    %v193 = vmul.f32 %v178, %v192
    %v195 = vrot.slane %v193, 7
    %v197 = vsub.f32 %v54, %v195
    %v198 = vlaneseq
    %v199 = vshrl.u32 %v198, 7
    %v200 = vsub.s32 0, %v199
    %v201 = vrot.slane %v192, %v200
    %v202 = vmul.f32 %v166, %v201
    %v203 = vlaneseq
    %v204 = vshrl.u32 %v203, 7
    %v205 = vsub.s32 1, %v204
    %v206 = vrot.slane %v197, %v205
    %v207 = vadd.f32 %v202, %v206
    %vm208 = vcmp.gt.f32.partialorder %v207, 0.0
    %v209 = vmul.f32 %v207, 0.2
    %v210 = vsel %vm208, %v207, %v209
    %v211 = vpack.c.bf16 %v210, %v210
    %v212 = vld [vmem:[#allocation7 + $0x18] sm:$0xf]
    %v213 = vld [vmem:[#allocation7 + $0x1c] sm:$0xf]
    %v214 = vld [vmem:[#allocation7 + $0x20] sm:$0xf]
    %v215 = vld [vmem:[#allocation7 + $0x24] sm:$0xf]
    %v216 = vld [vmem:[#allocation7 + $0x28] sm:$0xf]
    %v217 = vld [vmem:[#allocation7 + $0x2c] sm:$0xf]
    %v218 = vld [vmem:[#allocation7 + $0x30] sm:$0xf]
    %v219 = vld [vmem:[#allocation7 + $0x34] sm:$0xf]
    %v220 = vld [vmem:[#allocation7 + $0x38] sm:$0xf]
    %v221 = vld [vmem:[#allocation7 + $0x3c] sm:$0xf]
    %v222 = vld [vmem:[#allocation7 + $0x40] sm:$0xf]
    %v223 = vld [vmem:[#allocation7 + $0x44] sm:$0xf]
    %v224 = vld [vmem:[#allocation7 + $0x48] sm:$0xf]
    %v225 = vld [vmem:[#allocation7 + $0x4c] sm:$0xf]
    %v226 = vld [vmem:[#allocation7 + $0x50] sm:$0xf]
    %v227 = vld [vmem:[#allocation7 + $0x54] sm:$0xf]
    %v244 = vunpack.c.l.b16 %v212
    %v245 = vunpack.c.l.b16 %v213
    %v246 = vunpack.c.l.b16 %v214
    %v247 = vunpack.c.l.b16 %v215
    %v248 = vunpack.c.l.b16 %v216
    %v249 = vunpack.c.l.b16 %v217
    %v250 = vunpack.c.l.b16 %v218
    %v251 = vunpack.c.l.b16 %v219
    %v252 = vunpack.c.l.b16 %v220
    %v253 = vunpack.c.l.b16 %v221
    %v254 = vunpack.c.l.b16 %v222
    %v255 = vunpack.c.l.b16 %v223
    %v256 = vunpack.c.l.b16 %v224
    %v257 = vunpack.c.l.b16 %v225
    %v258 = vunpack.c.l.b16 %v226
    %v259 = vunpack.c.l.b16 %v227
    %v260 = vpack.c.b16 %v245, %v244
    %v261 = vpack.c.b16 %v247, %v246
    %v262 = vpack.c.b16 %v249, %v248
    %v263 = vpack.c.b16 %v251, %v250
    %v264 = vpack.c.b16 %v253, %v252
    %v265 = vpack.c.b16 %v255, %v254
    %v266 = vpack.c.b16 %v257, %v256
    %v267 = vpack.c.b16 %v259, %v258
    %276 = vmatprep.subr.bf16.mxu0 0
    %277 = vmatpush1.bf16.msra.mxu0 %v260
    %278 = vmatprep.subr.bf16.mxu0 0
    %279 = vmatpush1.bf16.msra.mxu0 %v261
    %280 = vmatprep.subr.bf16.mxu0 0
    %281 = vmatpush1.bf16.msra.mxu0 %v262
    %282 = vmatprep.subr.bf16.mxu0 0
    %283 = vmatpush1.bf16.msra.mxu0 %v263
    %284 = vmatprep.subr.bf16.mxu0 0
    %285 = vmatpush1.bf16.msra.mxu0 %v264
    %286 = vmatprep.subr.bf16.mxu0 0
    %287 = vmatpush1.bf16.msra.mxu0 %v265
    %288 = vmatprep.subr.bf16.mxu0 0
    %289 = vmatpush1.bf16.msra.mxu0 %v266
    %290 = vmatprep.subr.bf16.mxu0 0
    %291 = vmatpush1.bf16.msra.mxu0 %v267
    %292 = vmatprep.subr.bf16.mxu0 0
    %293 = vmatpush1.bf16.msra.mxu0 0
    %294 = vmatprep.subr.bf16.mxu0 0
    %295 = vmatpush1.bf16.msra.mxu0 0
    %296 = vmatprep.subr.bf16.mxu0 0
    %297 = vmatpush1.bf16.msra.mxu0 0
    %298 = vmatprep.subr.bf16.mxu0 0
    %299 = vmatpush1.bf16.msra.mxu0 0
    %300 = vmatprep.subr.bf16.mxu0 0
    %301 = vmatpush1.bf16.msra.mxu0 0
    %302 = vmatprep.subr.bf16.mxu0 0
    %303 = vmatpush1.bf16.msra.mxu0 0
    %304 = vmatprep.subr.bf16.mxu0 0
    %305 = vmatpush1.bf16.msra.mxu0 0
    %306 = vmatprep.subr.bf16.mxu0 0
    %307 = vmatpush1.bf16.msra.mxu0 0
    %308 = vmatprep.mubr.bf16.mxu0 0
    %309 = vmatmul.mubr.bf16.gmra.mrb[0].mxu0 %v211
    %v310 = vpop.f32.mrb[0].mxu0
    %v311 = vadd.f32 0.0, %v310
    %v312 = vpop.f32.mrb[0].mxu0
    %v313 = vpop.f32.mrb[0].mxu0
    %v314 = vpop.f32.mrb[0].mxu0
    %315 = vdwg.mxu0
    %v316 = vrot.slane %v311, 4
    %v317 = vadd.f32 %v311, %v316
    %v318 = vrot.slane %v317, 2
    %v319 = vadd.f32 %v317, %v318
    %v320 = vrot.slane %v319, 1
    %v321 = vadd.f32 %v319, %v320
    %v322 = vmul.f32 %v321, %v177
    %v323 = vmul.f32 %v311, %v311
    %v324 = vrot.slane %v323, 4
    %v325 = vadd.f32 %v323, %v324
    %v326 = vrot.slane %v325, 2
    %v327 = vadd.f32 %v325, %v326
    %v328 = vrot.slane %v327, 1
    %v329 = vadd.f32 %v327, %v328
    %v330 = vmul.f32 %v329, %v177
    %v331 = vmul.f32 %v322, %v322
    %v332 = vsub.f32 %v330, %v331
    %v333 = vmax.f32 %v332, 0.0
    %v334 = vadd.f32 %v333, 1e-05
    %v335 = vrsqrt.pop %v334
    %v336 = vmul.f32 %v54, %v335
    %v337 = vmul.f32 %v322, %v336
    %v339 = vrot.slane %v337, 7
    %v341 = vsub.f32 %v54, %v339
    %v342 = vlaneseq
    %v343 = vshrl.u32 %v342, 7
    %v344 = vsub.s32 2, %v343
    %v345 = vrot.slane %v336, %v344
    %v346 = vmul.f32 %v311, %v345
    %v347 = vlaneseq
    %v348 = vshrl.u32 %v347, 7
    %v349 = vsub.s32 3, %v348
    %v350 = vrot.slane %v341, %v349
    %v351 = vadd.f32 %v346, %v350
    %vm352 = vcmp.gt.f32.partialorder %v351, 0.0
    %v353 = vmul.f32 %v351, 0.2
    %v354 = vsel %vm352, %v351, %v353
    %v355 = vpack.c.bf16 %v354, %v354
    %v356 = vld [vmem:[#allocation7 + $0x58] sm:$0xf]
    %v357 = vld [vmem:[#allocation7 + $0x5c] sm:$0xf]
    %v358 = vld [vmem:[#allocation7 + $0x60] sm:$0xf]
    %v359 = vld [vmem:[#allocation7 + $0x64] sm:$0xf]
    %v360 = vld [vmem:[#allocation7 + $0x68] sm:$0xf]
    %v361 = vld [vmem:[#allocation7 + $0x6c] sm:$0xf]
    %v362 = vld [vmem:[#allocation7 + $0x70] sm:$0xf]
    %v363 = vld [vmem:[#allocation7 + $0x74] sm:$0xf]
    %v364 = vld [vmem:[#allocation7 + $0x78] sm:$0xf]
    %v365 = vld [vmem:[#allocation7 + $0x7c] sm:$0xf]
    %v366 = vld [vmem:[#allocation7 + $0x80] sm:$0xf]
    %v367 = vld [vmem:[#allocation7 + $0x84] sm:$0xf]
    %v368 = vld [vmem:[#allocation7 + $0x88] sm:$0xf]
    %v369 = vld [vmem:[#allocation7 + $0x8c] sm:$0xf]
    %v370 = vld [vmem:[#allocation7 + $0x90] sm:$0xf]
    %v371 = vld [vmem:[#allocation7 + $0x94] sm:$0xf]
    %v372 = vlaneseq
    %v373 = vshrl.u32 %v372, 7
    %v374 = vsub.s32 4, %v373
    %v375 = vrot.slane %v54, %v374
    %v392 = vunpack.c.l.b16 %v356
    %v393 = vunpack.c.l.b16 %v357
    %v394 = vunpack.c.l.b16 %v358
    %v395 = vunpack.c.l.b16 %v359
    %v396 = vunpack.c.l.b16 %v360
    %v397 = vunpack.c.l.b16 %v361
    %v398 = vunpack.c.l.b16 %v362
    %v399 = vunpack.c.l.b16 %v363
    %v400 = vunpack.c.l.b16 %v364
    %v401 = vunpack.c.l.b16 %v365
    %v402 = vunpack.c.l.b16 %v366
    %v403 = vunpack.c.l.b16 %v367
    %v404 = vunpack.c.l.b16 %v368
    %v405 = vunpack.c.l.b16 %v369
    %v406 = vunpack.c.l.b16 %v370
    %v407 = vunpack.c.l.b16 %v371
    %v408 = vpack.c.b16 %v393, %v392
    %v409 = vpack.c.b16 %v395, %v394
    %v410 = vpack.c.b16 %v397, %v396
    %v411 = vpack.c.b16 %v399, %v398
    %v412 = vpack.c.b16 %v401, %v400
    %v413 = vpack.c.b16 %v403, %v402
    %v414 = vpack.c.b16 %v405, %v404
    %v415 = vpack.c.b16 %v407, %v406
    %424 = vmatprep.subr.bf16.mxu0 0
    %425 = vmatpush1.bf16.msra.mxu0 %v408
    %426 = vmatprep.subr.bf16.mxu0 0
    %427 = vmatpush1.bf16.msra.mxu0 %v409
    %428 = vmatprep.subr.bf16.mxu0 0
    %429 = vmatpush1.bf16.msra.mxu0 %v410
    %430 = vmatprep.subr.bf16.mxu0 0
    %431 = vmatpush1.bf16.msra.mxu0 %v411
    %432 = vmatprep.subr.bf16.mxu0 0
    %433 = vmatpush1.bf16.msra.mxu0 %v412
    %434 = vmatprep.subr.bf16.mxu0 0
    %435 = vmatpush1.bf16.msra.mxu0 %v413
    %436 = vmatprep.subr.bf16.mxu0 0
    %437 = vmatpush1.bf16.msra.mxu0 %v414
    %438 = vmatprep.subr.bf16.mxu0 0
    %439 = vmatpush1.bf16.msra.mxu0 %v415
    %440 = vmatprep.subr.bf16.mxu0 0
    %441 = vmatpush1.bf16.msra.mxu0 0
    %442 = vmatprep.subr.bf16.mxu0 0
    %443 = vmatpush1.bf16.msra.mxu0 0
    %444 = vmatprep.subr.bf16.mxu0 0
    %445 = vmatpush1.bf16.msra.mxu0 0
    %446 = vmatprep.subr.bf16.mxu0 0
    %447 = vmatpush1.bf16.msra.mxu0 0
    %448 = vmatprep.subr.bf16.mxu0 0
    %449 = vmatpush1.bf16.msra.mxu0 0
    %450 = vmatprep.subr.bf16.mxu0 0
    %451 = vmatpush1.bf16.msra.mxu0 0
    %452 = vmatprep.subr.bf16.mxu0 0
    %453 = vmatpush1.bf16.msra.mxu0 0
    %454 = vmatprep.subr.bf16.mxu0 0
    %455 = vmatpush1.bf16.msra.mxu0 0
    %456 = vmatprep.mubr.bf16.mxu0 0
    %457 = vmatmul.mubr.bf16.gmra.mrb[0].mxu0 %v355
    %v458 = vpop.f32.mrb[0].mxu0
    %v459 = vadd.f32 %v375, %v458
    %v460 = vpop.f32.mrb[0].mxu0
    %v461 = vpop.f32.mrb[0].mxu0
    %v462 = vpop.f32.mrb[0].mxu0
    %463 = vdwg.mxu0
    %v464 = vxor.u32 %v459, 2147483648
    %v465 = vmul.f32 %v464, 1.442695
    %v466 = vpow.pop %v465
    %v467 = vadd.f32 %v466, 1.0
    %v468 = vrcp.pop %v467
    %v469 = vmul.f32 1.0, %v468
    %470 = vst [vmem:[#allocation8] sm:$0xff] %v469
    // Predicated region
    $region26: #{_colorer_forward.1} parent=1 // pred_check
      _
    $region27: #{_colorer_forward.1} parent=1 // pred_check_branch
      %472 = sbr.rel (0) target = $region29
    $region28: #{_colorer_forward.1} parent=1 // pred_region
      %s474 = ssub.s32 128, 128
      %475 = vsyncadd [#allocation4], %s474
      %s477 = sshll.u32 [#allocation8], 4
      %s478 = int_to_ptr.vmem [resolvable:$true] %s477
      %480 = dma.vmem_to_hbm [thread:$0]  %s478, 128, %s3, [#allocation4]
    $region29: #{_colorer_forward.1} parent=1 // pred_fallthru
      _
    // Predicated region
    $region30: #{_colorer_forward.1} parent=1 // pred_check
      _
    $region31: #{_colorer_forward.1} parent=1 // pred_check_branch
      %482 = sbr.rel (0) target = $region33
    $region32: #{_colorer_forward.1} parent=1 // pred_region
      %483 = dma.done [#allocation4], 128
    $region33: #{_colorer_forward.1} parent=1 // pred_fallthru
      _
    %484 = vsyncpa [#allocation3], 1
    %485 = vsyncpa [#allocation6], 1
    %486 = vsyncpa [#allocation4], 1

</llo_original>
